<compile_context>
chip_gen: v7x
topology: tpu7x:2x2x1
jax: 0.10.0
libtpu: 0.0.40
codegen_flags: <defaults>
</compile_context>

<pallas_src>
import functools
import numpy as np
import jax
import jax.numpy as jnp
from jax.experimental import pallas as pl
from jax.experimental.pallas import tpu as pltpu

# Fixed smoothing taps (the module's registered buffer): corner / edge / centre.
_C, _E, _M = 0.0751, 0.1238, 0.2042


def _combine(x, U, D):
    """x, U, D: (TN, TH, W) f32; U/D are the (reflection-corrected) row-above /
    row-below images.  Returns the exact 3x3 weighted sum."""
    W = x.shape[2]
    A = U + D
    P = _C * A + _E * x            # contributes via left/right column neighbours
    Q = _E * A + _M * x            # contributes at the centre column
    if W % 128 == 0:
        # Lane-aligned width: XLU rotates, no lane-misaligned temporaries.
        a = pltpu.roll(P, 1, axis=2)
        b = pltpu.roll(P, -1, axis=2)
    else:
        # Small / ragged width: same-width lane concats (dummy boundary columns
        # are overwritten below).
        a = jnp.concatenate([P[:, :, :1], P[:, :, :W - 1]], axis=2)
        b = jnp.concatenate([P[:, :, 1:], P[:, :, W - 1:]], axis=2)
    col = jax.lax.broadcasted_iota(jnp.int32, x.shape, 2)
    S = a + b                      # interior: P[., j-1] + P[., j+1]
    # ReflectionPad2d(1) along W: col 0 uses col 1 twice, col W-1 uses col W-2.
    S = jnp.where(col == 0, 2.0 * P[:, :, 1:2], S)
    S = jnp.where(col == W - 1, 2.0 * P[:, :, W - 2:W - 1], S)
    return S + Q


def _smooth_whole_kernel(x_ref, o_ref):
    """Path A: whole images per block.  x_ref/o_ref: (TN, H, W)."""
    x = x_ref[...].astype(jnp.float32)
    H = x.shape[1]
    # Reflected up/down rows built with 1-row sublane shifts (lane dim unchanged):
    # row -1 -> row 1, row H -> row H-2 (PyTorch reflect semantics).
    U = jnp.concatenate([x[:, 1:2, :], x[:, :H - 1, :]], axis=1)
    D = jnp.concatenate([x[:, 1:, :], x[:, H - 2:H - 1, :]], axis=1)
    o_ref[...] = _combine(x, U, D).astype(o_ref.dtype)


def _smooth_htile_kernel(xc_ref, xt_ref, xb_ref, o_ref, *, H):
    """Path B: H-tiled images.  xc_ref: (1, TH, W) centre rows [h*TH, h*TH+TH);
    xt_ref/xb_ref: (1, 8, W) halo blocks holding the rows adjacent to the tile
    (row h*TH-1 lives at sublane 7, row (h+1)*TH at sublane 0)."""
    x = xc_ref[...].astype(jnp.float32)
    TH = x.shape[1]
    t = xt_ref[:, 7:8, :].astype(jnp.float32)     # row above the tile (dummy for h==0)
    b = xb_ref[:, 0:1, :].astype(jnp.float32)     # row below the tile (dummy for last tile)
    h = pl.program_id(1)
    U = jnp.concatenate([t, x[:, :TH - 1, :]], axis=1)    # raw row i-1
    D = jnp.concatenate([x[:, 1:, :], b], axis=1)         # raw row i+1
    # Reflection at the global image top/bottom, from global row indices (also
    # makes ragged H tiles correct: rows past H are masked on writeback anyway).
    grow = h * TH + jax.lax.broadcasted_iota(jnp.int32, x.shape, 1)
    U = jnp.where(grow == 0, D, U)            # row -1 -> row 1
    D = jnp.where(grow == H - 1, U, D)        # row H  -> row H-2
    o_ref[...] = _combine(x, U, D).astype(o_ref.dtype)


def _vmem_plan():
    """Returns (vmem_limit_bytes, max f32 elements per block), per generation."""
    phys = None
    try:
        info = pltpu.get_tpu_info()
        phys = int(getattr(info, "vmem_capacity_bytes", 0) or 0) or None
    except Exception:
        phys = None
    if phys is None:
        phys = 64 * 1024 * 1024                      # conservative (v7x-sized)
    limit = max(32 * 1024 * 1024, min(phys * 3 // 4, 96 * 1024 * 1024))
    # Peak ~= 2x in + 2x out (double buffered) + ~6 f32 temporaries ~= 10-12 blocks.
    block_bytes = max(1 << 20, limit // 12)          # ~4 MiB on v7x, ~8 MiB on v5e/v6e
    return int(limit), int(block_bytes) // 4


def smooth_depthwise(x4):
    """x4: (B, C, H, W) -> ReflectionPad2d(1) + depthwise 3x3 smoothing."""
    B, C, H, W = x4.shape
    assert H >= 2 and W >= 2, "ReflectionPad2d(1) needs spatial dims >= 2"
    dt = x4.dtype if jnp.issubdtype(x4.dtype, jnp.floating) else jnp.float32
    N = B * C
    xf = x4.reshape(N, H, W).astype(dt)
    itemsize = jnp.dtype(dt).itemsize

    vmem_limit, max_elems = _vmem_plan()
    img_elems = H * W

    if img_elems <= max_elems or H < 8:
        # -------- Path A: whole images per block, grid over N only. --------
        # TODO(synk): extreme-aspect images (H < 8 with enormous W) are not
        # H-tiled and may exceed the VMEM budget; tile W with a halo if needed.
        TN = max(1, min(N, max_elems // max(1, img_elems)))
        if pl.cdiv(N, TN) == 1 and N >= 2:
            TN = pl.cdiv(N, 2)        # >= 2 grid steps: both v7x TCs get work
        grid = (pl.cdiv(N, TN),)      # ragged last block is masked; no jnp.pad
        out = pl.pallas_call(
            _smooth_whole_kernel,
            out_shape=jax.ShapeDtypeStruct((N, H, W), dt),
            grid_spec=pltpu.PrefetchScalarGridSpec(
                num_scalar_prefetch=0,
                grid=grid,
                in_specs=[pl.BlockSpec((TN, H, W), lambda n: (n, 0, 0))],
                out_specs=pl.BlockSpec((TN, H, W), lambda n: (n, 0, 0)),
            ),
            compiler_params=pltpu.CompilerParams(
                dimension_semantics=("parallel",),
                vmem_limit_bytes=vmem_limit),
            cost_estimate=pl.CostEstimate(
                flops=18 * N * H * W,
                bytes_accessed=2 * N * H * W * itemsize,
                transcendentals=0),
        )(xf)
    else:
        # -------- Path B: single image exceeds the block budget -> tile H. ----
        THB = max(1, min(max_elems // W, H) // 8)   # centre tile rows, in units of 8
        TH = 8 * THB                                # multiple of 8 (< H here)
        nblk8 = pl.cdiv(H, 8)                       # halo blocks are 8 rows tall
        grid_h = pl.cdiv(H, TH)
        kern = functools.partial(_smooth_htile_kernel, H=H)
        out = pl.pallas_call(
            kern,
            out_shape=jax.ShapeDtypeStruct((N, H, W), dt),
            grid_spec=pltpu.PrefetchScalarGridSpec(
                num_scalar_prefetch=0,
                grid=(N, grid_h),
                in_specs=[
                    # centre rows of the tile
                    pl.BlockSpec((1, TH, W), lambda n, h: (n, h, 0)),
                    # 8-row block containing global row h*TH-1 (clamped for h==0)
                    pl.BlockSpec((1, 8, W),
                                 lambda n, h: (n, jnp.maximum(h * THB - 1, 0), 0)),
                    # 8-row block containing global row (h+1)*TH (clamped at bottom)
                    pl.BlockSpec((1, 8, W),
                                 lambda n, h: (n, jnp.minimum((h + 1) * THB,
                                                              nblk8 - 1), 0)),
                ],
                out_specs=pl.BlockSpec((1, TH, W), lambda n, h: (n, h, 0)),
            ),
            compiler_params=pltpu.CompilerParams(
                dimension_semantics=("parallel", "parallel"),
                vmem_limit_bytes=vmem_limit),
            cost_estimate=pl.CostEstimate(
                flops=18 * N * H * W,
                bytes_accessed=2 * N * H * W * itemsize,
                transcendentals=0),
        )(xf, xf, xf)

    # TODO(synk): for tiny / non-128-multiple W a lane-dense layout with N on the
    # lane axis would avoid masked stores, but only pays off when B*C is O(128).
    return out.reshape(B, C, H, W)


def image_smooth_forward(x, chan):
    """ImageSmoothLayer(chan).forward for 2D / 3D / 4D inputs (PyTorch semantics)."""
    ndim = x.ndim
    if ndim == 2:
        x4 = x[None, None]                 # (1, 1, H, W), single-channel kernel
    elif ndim == 3:
        x4 = x[:, None]                    # (B, 1, H, W), single-channel kernel
    else:
        assert x.shape[1] == chan          # block-diagonal kernel == depthwise
        x4 = x
    y = smooth_depthwise(x4)
    if ndim == 2:
        return y[0, 0]
    if ndim == 3:
        return y[:, 0]
    return y


# Pure-JAX reference mirroring the PyTorch module exactly
# (reflect pad + full (C,C,3,3) block-diagonal conv2d).
def _reference(x4):
    _, C, _, _ = x4.shape
    f = jnp.asarray([[_C, _E, _C], [_E, _M, _E], [_C, _E, _C]], jnp.float32)
    wk = jnp.zeros((C, C, 3, 3), jnp.float32)
    wk = wk.at[jnp.arange(C), jnp.arange(C)].set(f)
    xp = jnp.pad(x4.astype(jnp.float32), ((0, 0), (0, 0), (1, 1), (1, 1)),
                 mode="reflect")
    return jax.lax.conv_general_dilated(
        xp, wk, window_strides=(1, 1), padding="VALID",
        dimension_numbers=("NCHW", "OIHW", "NCHW"))


if __name__ == "__main__":
    chan = 4
    B, H, W = 2, 16, 16
    key = jax.random.PRNGKey(0)
    k4, k3, k2 = jax.random.split(key, 3)

    x4 = jax.random.normal(k4, (B, chan, H, W), jnp.float32)   # 4D path
    x3 = jax.random.normal(k3, (B, H, W), jnp.float32)         # 3D path
    x2 = jax.random.normal(k2, (H, W), jnp.float32)            # 2D path

    fwd = jax.jit(functools.partial(image_smooth_forward, chan=chan))
    y4 = fwd(x4)
    y3 = fwd(x3)
    y2 = fwd(x2)
    jax.block_until_ready((y4, y3, y2))

    assert y4.shape == (B, chan, H, W)
    assert y3.shape == (B, H, W)
    assert y2.shape == (H, W)

    r4 = _reference(x4)
    r3 = _reference(x3[:, None])[:, 0]
    r2 = _reference(x2[None, None])[0, 0]
    np.testing.assert_allclose(np.asarray(y4), np.asarray(r4), rtol=1e-5, atol=1e-5)
    np.testing.assert_allclose(np.asarray(y3), np.asarray(r3), rtol=1e-5, atol=1e-5)
    np.testing.assert_allclose(np.asarray(y2), np.asarray(r2), rtol=1e-5, atol=1e-5)

    print("KERNEL_OK")
</pallas_src>

<mosaic_0001>
module attributes {stable_mosaic.version = 11 : i64} {
  func.func @_smooth_whole_kernel(%arg0: i32, %arg1: memref<4x16x16xf32, #tpu.memory_space<vmem>>, %arg2: memref<4x16x16xf32, #tpu.memory_space<vmem>>) attributes {dimension_semantics = [#tpu.dimension_semantics<parallel>], iteration_bounds = array<i64: 2>, scalar_prefetch = 0 : i64, scratch_operands = 0 : i64, tpu.core_type = #tpu.core_type<tc>, window_params = [{transform_indices = @transform_0, window_bounds = array<i64: 4, 16, 16>}, {transform_indices = @transform_1, window_bounds = array<i64: 4, 16, 16>}]} {
    %c0 = arith.constant 0 : index
    %c0_0 = arith.constant 0 : index
    %c0_1 = arith.constant 0 : index
    %0 = vector.load %arg1[%c0, %c0_0, %c0_1] : memref<4x16x16xf32, #tpu.memory_space<vmem>>, vector<4x16x16xf32>
    %1 = vector.extract_strided_slice %0 {offsets = [0, 1, 0], sizes = [4, 1, 16], strides = [1, 1, 1]} : vector<4x16x16xf32> to vector<4x1x16xf32>
    %2 = vector.extract_strided_slice %0 {offsets = [0, 0, 0], sizes = [4, 15, 16], strides = [1, 1, 1]} : vector<4x16x16xf32> to vector<4x15x16xf32>
    %3 = tpu.concatenate %1, %2 in 1 : vector<4x1x16xf32>, vector<4x15x16xf32> -> vector<4x16x16xf32>
    %4 = vector.extract_strided_slice %0 {offsets = [0, 1, 0], sizes = [4, 15, 16], strides = [1, 1, 1]} : vector<4x16x16xf32> to vector<4x15x16xf32>
    %5 = vector.extract_strided_slice %0 {offsets = [0, 14, 0], sizes = [4, 1, 16], strides = [1, 1, 1]} : vector<4x16x16xf32> to vector<4x1x16xf32>
    %6 = tpu.concatenate %4, %5 in 1 : vector<4x15x16xf32>, vector<4x1x16xf32> -> vector<4x16x16xf32>
    %7 = arith.addf %3, %6 : vector<4x16x16xf32>
    %cst = arith.constant 7.510000e-02 : f32
    %8 = vector.broadcast %cst : f32 to vector<4x16x16xf32>
    %9 = arith.mulf %8, %7 : vector<4x16x16xf32>
    %cst_2 = arith.constant 1.238000e-01 : f32
    %10 = vector.broadcast %cst_2 : f32 to vector<4x16x16xf32>
    %11 = arith.mulf %10, %0 : vector<4x16x16xf32>
    %12 = arith.addf %9, %11 : vector<4x16x16xf32>
    %cst_3 = arith.constant 1.238000e-01 : f32
    %13 = vector.broadcast %cst_3 : f32 to vector<4x16x16xf32>
    %14 = arith.mulf %13, %7 : vector<4x16x16xf32>
    %cst_4 = arith.constant 2.042000e-01 : f32
    %15 = vector.broadcast %cst_4 : f32 to vector<4x16x16xf32>
    %16 = arith.mulf %15, %0 : vector<4x16x16xf32>
    %17 = arith.addf %14, %16 : vector<4x16x16xf32>
    %18 = vector.extract_strided_slice %12 {offsets = [0, 0, 0], sizes = [4, 16, 1], strides = [1, 1, 1]} : vector<4x16x16xf32> to vector<4x16x1xf32>
    %19 = vector.extract_strided_slice %12 {offsets = [0, 0, 0], sizes = [4, 16, 15], strides = [1, 1, 1]} : vector<4x16x16xf32> to vector<4x16x15xf32>
    %20 = tpu.concatenate %18, %19 in 2 : vector<4x16x1xf32>, vector<4x16x15xf32> -> vector<4x16x16xf32>
    %21 = vector.extract_strided_slice %12 {offsets = [0, 0, 1], sizes = [4, 16, 15], strides = [1, 1, 1]} : vector<4x16x16xf32> to vector<4x16x15xf32>
    %22 = vector.extract_strided_slice %12 {offsets = [0, 0, 15], sizes = [4, 16, 1], strides = [1, 1, 1]} : vector<4x16x16xf32> to vector<4x16x1xf32>
    %23 = tpu.concatenate %21, %22 in 2 : vector<4x16x15xf32>, vector<4x16x1xf32> -> vector<4x16x16xf32>
    %24 = tpu.iota {dimensions = array<i32: 2>} : vector<4x16x16xi32>
    %25 = arith.addf %20, %23 : vector<4x16x16xf32>
    %c0_i32 = arith.constant 0 : i32
    %26 = vector.broadcast %c0_i32 : i32 to vector<4x16x16xi32>
    %27 = arith.cmpi eq, %24, %26 : vector<4x16x16xi32>
    %28 = vector.extract_strided_slice %12 {offsets = [0, 0, 1], sizes = [4, 16, 1], strides = [1, 1, 1]} : vector<4x16x16xf32> to vector<4x16x1xf32>
    %cst_5 = arith.constant 2.000000e+00 : f32
    %29 = vector.broadcast %cst_5 : f32 to vector<4x16x1xf32>
    %30 = arith.mulf %29, %28 : vector<4x16x1xf32>
    %31 = vector.shape_cast %30 : vector<4x16x1xf32> to vector<4x16x1xf32>
    %32 = vector.broadcast %31 : vector<4x16x1xf32> to vector<4x16x16xf32>
    %33 = arith.select %27, %32, %25 : vector<4x16x16xi1>, vector<4x16x16xf32>
    %c15_i32 = arith.constant 15 : i32
    %34 = vector.broadcast %c15_i32 : i32 to vector<4x16x16xi32>
    %35 = arith.cmpi eq, %24, %34 : vector<4x16x16xi32>
    %36 = vector.extract_strided_slice %12 {offsets = [0, 0, 14], sizes = [4, 16, 1], strides = [1, 1, 1]} : vector<4x16x16xf32> to vector<4x16x1xf32>
    %cst_6 = arith.constant 2.000000e+00 : f32
    %37 = vector.broadcast %cst_6 : f32 to vector<4x16x1xf32>
    %38 = arith.mulf %37, %36 : vector<4x16x1xf32>
    %39 = vector.shape_cast %38 : vector<4x16x1xf32> to vector<4x16x1xf32>
    %40 = vector.broadcast %39 : vector<4x16x1xf32> to vector<4x16x16xf32>
    %41 = arith.select %35, %40, %33 : vector<4x16x16xi1>, vector<4x16x16xf32>
    %42 = arith.addf %41, %17 : vector<4x16x16xf32>
    %c0_7 = arith.constant 0 : index
    %c0_8 = arith.constant 0 : index
    %c0_9 = arith.constant 0 : index
    %43 = vector.load %arg2[%c0_7, %c0_8, %c0_9] : memref<4x16x16xf32, #tpu.memory_space<vmem>>, vector<4x16x16xf32>
    tpu.vector_store %arg2[%c0_7, %c0_8, %c0_9], %42 {strides = array<i32>} : memref<4x16x16xf32, #tpu.memory_space<vmem>>, vector<4x16x16xf32>,
    return
  }
  func.func @transform_0(%arg0: i32) -> (i32, i32, i32) {
    %c0_i32 = arith.constant 0 : i32
    %c0_i32_0 = arith.constant 0 : i32
    %c0_i32_1 = arith.constant 0 : i32
    return %arg0, %c0_i32, %c0_i32_0 : i32, i32, i32
  }
  func.func @transform_1(%arg0: i32) -> (i32, i32, i32) {
    %c0_i32 = arith.constant 0 : i32
    %c0_i32_0 = arith.constant 0 : i32
    %c0_i32_1 = arith.constant 0 : i32
    return %arg0, %c0_i32, %c0_i32_0 : i32, i32, i32
  }
}

</mosaic_0001>

<llo_original>
// kernel: image_smooth_forward.1
$region0: #{image_smooth_forward.1}
  #allocation0 [shape = 'u32[]', space=smem, size = 0x4, offset = 0x4, fixed_abs, tag = 'smem constant byte address 0x4 - core index']
  #allocation1 [shape = 'u32[144,128]{1,0:T(1,128)}', space=vmem, size = 0x12000, scoped, tag = 'internal scratch']
  %s0 = inlined_call_operand.hbm [shape: f32[8,16,16], index: 0, kind: input, shape index: {}]
  %s1 = inlined_call_operand.hbm [shape: f32[8,16,16], index: 1, kind: output, shape index: {}]
  %s2 = sld [smem:[#allocation0]]
  $region41: #{image_smooth_forward.1} parent=0
    _
  %s4 = ssub.s32 1, %s2
  %s5 = scalar_select 0, %s4, %s2
  $region1: #{image_smooth_forward.1} parent=0
    #allocation2 [shape = 'u8[65536]{0}', space=vmem, size = 0x10000, scoped, tag = 'input window, operand 0']
    #allocation3 [shape = 's32[2]{0}', space=sflag, size = 0x8, scoped, tag = 'scoped memory for image_smooth_forward.1']
    #allocation4 [shape = 's32[2]{0}', space=sflag, size = 0x8, scoped, tag = 'scoped memory for image_smooth_forward.1']
    #allocation5 [shape = 'u8[65536]{0}', space=vmem, size = 0x10000, scoped, tag = 'output window, operand 0']
    %6 = vsyncpa [#allocation3], 0
    %s7 = scalar_lea.sflag [#allocation3], 1
    %8 = vsyncpa %s7, 0
    %9 = vsyncpa [#allocation4], 0
    %s10 = scalar_lea.sflag [#allocation4], 1
    %11 = vsyncpa %s10, 0
    loop: start=0, step=1, limit=4
    $region2: #{image_smooth_forward.1} parent=1 // loop_pre_header
      _
    $region3: #{image_smooth_forward.1} parent=1 // loop_header
      %s13 = sphi 0, %s17
      %p14 = scmp.ge.s32.totalorder %s13, 4
      %s23 = sphi 0, %s25
      %s26 = sphi 0, %s23
      %s27 = sphi 0, %s26
      %s43 = sphi 0, %s27
      %s49 = sphi 0, %s51
      %s52 = sphi 0, %s49
      %s53 = sphi 0, %s52
      %s69 = sphi 0, %s53
    $region4: #{image_smooth_forward.1} parent=1 // loop_header_branch
      %16 = sbr.rel (%p14) target = $region8
    $region5: #{image_smooth_forward.1} parent=1 // loop_body
      %s18 = ssub.s32 %s13, 1
      %s19 = ssub.s32 %s13, 2
      %s20 = sadd.s32 %s13, 1
      %s21 = ssub.s32 %s13, %s20
      %p22 = scmp.eq.s32.totalorder %s21, 0
      %s24 = sadd.s32 %s23, 1
      %s25 = scalar_select %p22, %s23, %s24
      %p28 = pneg %p22
      %p29 = scmp.eq.s32.totalorder %s13, 1
      %p30 = por %p28, %p29
      %p31 = scmp.ne.s32.totalorder %s23, %s26
      %p32 = scmp.eq.s32.totalorder %s13, 0
      %p33 = por %p31, %p32
      %p34 = scmp.ne.s32.totalorder %s23, %s26
      %p35 = scmp.eq.s32.totalorder %s18, 1
      %p36 = por %p34, %p35
      %p37 = scmp.ne.s32.totalorder %s26, %s27
      %p38 = scmp.eq.s32.totalorder %s18, 0
      %p39 = por %p37, %p38
      %p40 = scmp.ne.s32.totalorder %s26, %s27
      %p41 = scmp.eq.s32.totalorder %s19, 1
      %p42 = por %p40, %p41
      %p44 = scmp.ne.s32.totalorder %s27, %s43
      %p45 = scmp.eq.s32.totalorder %s19, 0
      %p46 = por %p44, %p45
      %s47 = ssub.s32 %s13, %s20
      %p48 = scmp.eq.s32.totalorder %s47, 0
      %s50 = sadd.s32 %s49, 1
      %s51 = scalar_select %p48, %s49, %s50
      %p54 = pneg %p48
      %p55 = scmp.eq.s32.totalorder %s13, 1
      %p56 = por %p54, %p55
      %p57 = scmp.ne.s32.totalorder %s49, %s52
      %p58 = scmp.eq.s32.totalorder %s13, 0
      %p59 = por %p57, %p58
      %p60 = scmp.ne.s32.totalorder %s49, %s52
      %p61 = scmp.eq.s32.totalorder %s18, 1
      %p62 = por %p60, %p61
      %p63 = scmp.ne.s32.totalorder %s52, %s53
      %p64 = scmp.eq.s32.totalorder %s18, 0
      %p65 = por %p63, %p64
      %p66 = scmp.ne.s32.totalorder %s52, %s53
      %p67 = scmp.eq.s32.totalorder %s19, 1
      %p68 = por %p66, %p67
      %p70 = scmp.ne.s32.totalorder %s53, %s69
      %p71 = scmp.eq.s32.totalorder %s19, 0
      %p72 = por %p70, %p71
      %p73 = scmp.le.s32.totalorder 1, %s13
      %p74 = scmp.lt.s32.totalorder %s13, 3
      %p75 = pnand %p73, %p74
      %p76 = pneg %p75
      // Predicated region
      $region9: #{image_smooth_forward.1} parent=5 // pred_check
        _
      $region10: #{image_smooth_forward.1} parent=5 // pred_check_branch
        %78 = sbr.rel (%p75) target = $region12
      $region11: #{image_smooth_forward.1} parent=5 // pred_region
        %s79 = ssub.s32 %s13, 1
      $region12: #{image_smooth_forward.1} parent=5 // pred_fallthru
        _
      %p80 = scmp.lt.s32.totalorder %s13, 2
      // Predicated region
      $region13: #{image_smooth_forward.1} parent=5 // pred_check
        %p81 = pneg %p80
      $region14: #{image_smooth_forward.1} parent=5 // pred_check_branch
        %83 = sbr.rel (%p81) target = $region16
      $region15: #{image_smooth_forward.1} parent=5 // pred_region
        // Predicated region
        $region17: #{image_smooth_forward.1} parent=15 // pred_check
          %p84 = pneg %p33
        $region18: #{image_smooth_forward.1} parent=15 // pred_check_branch
          %86 = sbr.rel (%p84) target = $region20
        $region19: #{image_smooth_forward.1} parent=15 // pred_region
          %s87 = sand.u32 %s23, 1
          %s88 = scalar_lea.sflag [#allocation3], %s87
          %s89 = sand.u32 %s23, 1
          %s90 = smul.addr %s89, 64
          %s91 = scalar_lea.vmem [#allocation2], %s90
          %s92 = smul.u32 4, %s13
          %s94 = ssub.s32 1024, 1024
          %95 = vsyncadd %s88, %s94
          %s96 = smul.addr %s92, 2
          %s97 = smul.addr %s96, 128
          %s98 = scalar_lea.hbm %s0, %s97
          %s99 = sshll.u32 %s91, 4
          %s100 = int_to_ptr.vmem [resolvable:$true] %s99
          %105 = dma.hbm_to_vmem [thread:$0]  %s98, 1024, %s100, %s88, 128, 128, 8
        $region20: #{image_smooth_forward.1} parent=15 // pred_fallthru
          _
      $region16: #{image_smooth_forward.1} parent=5 // pred_fallthru
        _
      %p106 = scmp.le.s32.totalorder 1, %s13
      %p107 = scmp.lt.s32.totalorder %s13, 3
      %p108 = pnand %p106, %p107
      %p109 = pneg %p108
      // Predicated region
      $region21: #{image_smooth_forward.1} parent=5 // pred_check
        _
      $region22: #{image_smooth_forward.1} parent=5 // pred_check_branch
        %111 = sbr.rel (%p108) target = $region24
      $region23: #{image_smooth_forward.1} parent=5 // pred_region
        %s112 = ssub.s32 %s13, 1
        %s113 = sand.u32 %s26, 1
        %s114 = scalar_lea.sflag [#allocation3], %s113
        %s115 = sand.u32 %s26, 1
        %s116 = smul.addr %s115, 64
        %s117 = scalar_lea.vmem [#allocation2], %s116
        // Predicated region
        $region25: #{image_smooth_forward.1} parent=23 // pred_check
          %p118 = pneg %p39
        $region26: #{image_smooth_forward.1} parent=23 // pred_check_branch
          %120 = sbr.rel (%p118) target = $region28
        $region27: #{image_smooth_forward.1} parent=23 // pred_region
          %121 = dma.done %s114, 1024
        $region28: #{image_smooth_forward.1} parent=23 // pred_fallthru
          _
        %s122 = sand.u32 %s26, 1
        %s123 = scalar_lea.sflag [#allocation3], %s122
        %s124 = sand.u32 %s26, 1
        %s125 = smul.addr %s124, 64
        %s126 = scalar_lea.vmem [#allocation2], %s125
        %p127 = pneg %p39
        %p128 = pneg %p36
        %p129 = pneg %p65
        %p130 = pneg %p62
        %s131 = sand.u32 %s52, 1
        %s132 = scalar_lea.sflag [#allocation4], %s131
        %s133 = sand.u32 %s52, 1
        %s134 = smul.addr %s133, 64
        %s135 = scalar_lea.vmem [#allocation5], %s134
        %s136 = smul.u32 4, %s18
        %s137 = smul.u32 4, %s18
        %v138 = vld [vmem:[%s117] sm:$0xff]
        %v139 = vld [vmem:[%s117 + $0x8] sm:$0xff]
        %v140 = vld [vmem:[%s117 + $0x10] sm:$0xff]
        %v141 = vld [vmem:[%s117 + $0x18] sm:$0xff]
        %v142 = vld [vmem:[%s117 + $0x20] sm:$0xff]
        %v143 = vld [vmem:[%s117 + $0x28] sm:$0xff]
        %v144 = vld [vmem:[%s117 + $0x30] sm:$0xff]
        %v145 = vld [vmem:[%s117 + $0x38] sm:$0xff]
        %v150 = vrot.slane %v138, 1
        %v151 = vrot.slane %v140, 1
        %v152 = vrot.slane %v142, 1
        %v153 = vrot.slane %v144, 1
        %vm162 = vcmask 1040384
        %v163 = vrot.slane %v138, 7
        %v164 = vrot.slane %v139, 7
        %v165 = vsel %vm162, %v163, %v164
        %v166 = vrot.slane %v140, 7
        %v167 = vrot.slane %v141, 7
        %v168 = vsel %vm162, %v166, %v167
        %v169 = vrot.slane %v142, 7
        %v170 = vrot.slane %v143, 7
        %v171 = vsel %vm162, %v169, %v170
        %v172 = vrot.slane %v144, 7
        %v173 = vrot.slane %v145, 7
        %v174 = vsel %vm162, %v172, %v173
        %v183 = vsel %vm162, %v150, %v163
        %v184 = vsel %vm162, %v151, %v166
        %v185 = vsel %vm162, %v152, %v169
        %v186 = vsel %vm162, %v153, %v172
        %vm187 = vcmask 1046528
        %v188 = vrot.slane %v139, 1
        %v189 = vsel %vm187, %v150, %v188
        %v190 = vrot.slane %v141, 1
        %v191 = vsel %vm187, %v151, %v190
        %v192 = vrot.slane %v143, 1
        %v193 = vsel %vm187, %v152, %v192
        %v194 = vrot.slane %v145, 1
        %v195 = vsel %vm187, %v153, %v194
        %v208 = vsel %vm187, %v188, %v164
        %v209 = vsel %vm187, %v190, %v167
        %v210 = vsel %vm187, %v192, %v170
        %v211 = vsel %vm187, %v194, %v173
        %v212 = vadd.f32 %v183, %v189
        %v213 = vadd.f32 %v165, %v208
        %v214 = vadd.f32 %v184, %v191
        %v215 = vadd.f32 %v168, %v209
        %v216 = vadd.f32 %v185, %v193
        %v217 = vadd.f32 %v171, %v210
        %v218 = vadd.f32 %v186, %v195
        %v219 = vadd.f32 %v174, %v211
        %v220 = vmul.f32 %v212, 0.0751
        %v221 = vmul.f32 %v213, 0.0751
        %v222 = vmul.f32 %v214, 0.0751
        %v223 = vmul.f32 %v215, 0.0751
        %v224 = vmul.f32 %v216, 0.0751
        %v225 = vmul.f32 %v217, 0.0751
        %v226 = vmul.f32 %v218, 0.0751
        %v227 = vmul.f32 %v219, 0.0751
        %v228 = vmul.f32 %v138, 0.1238
        %v229 = vmul.f32 %v139, 0.1238
        %v230 = vmul.f32 %v140, 0.1238
        %v231 = vmul.f32 %v141, 0.1238
        %v232 = vmul.f32 %v142, 0.1238
        %v233 = vmul.f32 %v143, 0.1238
        %v234 = vmul.f32 %v144, 0.1238
        %v235 = vmul.f32 %v145, 0.1238
        %v236 = vadd.f32 %v220, %v228
        %v237 = vadd.f32 %v221, %v229
        %v238 = vadd.f32 %v222, %v230
        %v239 = vadd.f32 %v223, %v231
        %v240 = vadd.f32 %v224, %v232
        %v241 = vadd.f32 %v225, %v233
        %v242 = vadd.f32 %v226, %v234
        %v243 = vadd.f32 %v227, %v235
        %v244 = vmul.f32 %v212, 0.1238
        %v245 = vmul.f32 %v213, 0.1238
        %v246 = vmul.f32 %v214, 0.1238
        %v247 = vmul.f32 %v215, 0.1238
        %v248 = vmul.f32 %v216, 0.1238
        %v249 = vmul.f32 %v217, 0.1238
        %v250 = vmul.f32 %v218, 0.1238
        %v251 = vmul.f32 %v219, 0.1238
        %v252 = vmul.f32 %v138, 0.2042
        %v253 = vmul.f32 %v139, 0.2042
        %v254 = vmul.f32 %v140, 0.2042
        %v255 = vmul.f32 %v141, 0.2042
        %v256 = vmul.f32 %v142, 0.2042
        %v257 = vmul.f32 %v143, 0.2042
        %v258 = vmul.f32 %v144, 0.2042
        %v259 = vmul.f32 %v145, 0.2042
        %v260 = vadd.f32 %v244, %v252
        %v261 = vadd.f32 %v245, %v253
        %v262 = vadd.f32 %v246, %v254
        %v263 = vadd.f32 %v247, %v255
        %v264 = vadd.f32 %v248, %v256
        %v265 = vadd.f32 %v249, %v257
        %v266 = vadd.f32 %v250, %v258
        %v267 = vadd.f32 %v251, %v259
        %276 = vrot.lane.b32.xlu0 %v236, 1
        %v277 = vpop.permute.xlu0 %276
        %278 = vrot.lane.b32.xlu0 %v237, 1
        %v279 = vpop.permute.xlu0 %278
        %280 = vrot.lane.b32.xlu0 %v238, 1
        %v281 = vpop.permute.xlu0 %280
        %282 = vrot.lane.b32.xlu0 %v239, 1
        %v283 = vpop.permute.xlu0 %282
        %284 = vrot.lane.b32.xlu0 %v240, 1
        %v285 = vpop.permute.xlu0 %284
        %286 = vrot.lane.b32.xlu0 %v241, 1
        %v287 = vpop.permute.xlu0 %286
        %288 = vrot.lane.b32.xlu0 %v242, 1
        %v289 = vpop.permute.xlu0 %288
        %290 = vrot.lane.b32.xlu0 %v243, 1
        %v291 = vpop.permute.xlu0 %290
        %vm300 = vcmask 7168
        %v301 = vsel %vm300, %v236, %v277
        %v302 = vsel %vm300, %v237, %v279
        %v303 = vsel %vm300, %v238, %v281
        %v304 = vsel %vm300, %v239, %v283
        %v305 = vsel %vm300, %v240, %v285
        %v306 = vsel %vm300, %v241, %v287
        %v307 = vsel %vm300, %v242, %v289
        %v308 = vsel %vm300, %v243, %v291
        %309 = vrot.lane.b32.xlu0 %v236, 127
        %v310 = vpop.permute.xlu0 %309
        %311 = vrot.lane.b32.xlu0 %v237, 127
        %v312 = vpop.permute.xlu0 %311
        %313 = vrot.lane.b32.xlu0 %v238, 127
        %v314 = vpop.permute.xlu0 %313
        %315 = vrot.lane.b32.xlu0 %v239, 127
        %v316 = vpop.permute.xlu0 %315
        %317 = vrot.lane.b32.xlu0 %v240, 127
        %v318 = vpop.permute.xlu0 %317
        %319 = vrot.lane.b32.xlu0 %v241, 127
        %v320 = vpop.permute.xlu0 %319
        %321 = vrot.lane.b32.xlu0 %v242, 127
        %v322 = vpop.permute.xlu0 %321
        %323 = vrot.lane.b32.xlu0 %v243, 127
        %v324 = vpop.permute.xlu0 %323
        %vm333 = vcmask 121856
        %v334 = vsel %vm333, %v310, %v236
        %v335 = vsel %vm333, %v312, %v237
        %v336 = vsel %vm333, %v314, %v238
        %v337 = vsel %vm333, %v316, %v239
        %v338 = vsel %vm333, %v318, %v240
        %v339 = vsel %vm333, %v320, %v241
        %v340 = vsel %vm333, %v322, %v242
        %v341 = vsel %vm333, %v324, %v243
        %v342 = vlaneseq
        %v343 = vand.u32 %v342, 127
        %v344 = vadd.f32 %v301, %v334
        %v345 = vadd.f32 %v302, %v335
        %v346 = vadd.f32 %v303, %v336
        %v347 = vadd.f32 %v304, %v337
        %v348 = vadd.f32 %v305, %v338
        %v349 = vadd.f32 %v306, %v339
        %v350 = vadd.f32 %v307, %v340
        %v351 = vadd.f32 %v308, %v341
        %vm352 = vcmp.eq.s32.totalorder %v343, 0
        %v353 = vmul.f32 %v236, 2.0
        %v354 = vmul.f32 %v237, 2.0
        %v355 = vmul.f32 %v238, 2.0
        %v356 = vmul.f32 %v239, 2.0
        %v357 = vmul.f32 %v240, 2.0
        %v358 = vmul.f32 %v241, 2.0
        %v359 = vmul.f32 %v242, 2.0
        %v360 = vmul.f32 %v243, 2.0
        %362 = vset.pattern.permute.xlu0 1
        %363 = vperm.xlu0 %362, %v353
        %v364 = vpop.permute.xlu0 %363
        %367 = vset.pattern.permute.xlu0 1
        %368 = vperm.xlu0 %367, %v354
        %v369 = vpop.permute.xlu0 %368
        %372 = vset.pattern.permute.xlu0 1
        %373 = vperm.xlu0 %372, %v355
        %v374 = vpop.permute.xlu0 %373
        %377 = vset.pattern.permute.xlu0 1
        %378 = vperm.xlu0 %377, %v356
        %v379 = vpop.permute.xlu0 %378
        %382 = vset.pattern.permute.xlu0 1
        %383 = vperm.xlu0 %382, %v357
        %v384 = vpop.permute.xlu0 %383
        %387 = vset.pattern.permute.xlu0 1
        %388 = vperm.xlu0 %387, %v358
        %v389 = vpop.permute.xlu0 %388
        %392 = vset.pattern.permute.xlu0 1
        %393 = vperm.xlu0 %392, %v359
        %v394 = vpop.permute.xlu0 %393
        %397 = vset.pattern.permute.xlu0 1
        %398 = vperm.xlu0 %397, %v360
        %v399 = vpop.permute.xlu0 %398
        %v401 = vsel %vm352, %v364, %v344
        %v402 = vsel %vm352, %v369, %v345
        %v403 = vsel %vm352, %v374, %v346
        %v404 = vsel %vm352, %v379, %v347
        %v405 = vsel %vm352, %v384, %v348
        %v406 = vsel %vm352, %v389, %v349
        %v407 = vsel %vm352, %v394, %v350
        %v408 = vsel %vm352, %v399, %v351
        %vm409 = vcmp.eq.s32.totalorder %v343, 15
        %410 = vset.pattern.permute.xlu0 14
        %411 = vperm.xlu0 %410, %v353
        %v412 = vpop.permute.xlu0 %411
        %414 = vset.pattern.permute.xlu0 14
        %415 = vperm.xlu0 %414, %v354
        %v416 = vpop.permute.xlu0 %415
        %418 = vset.pattern.permute.xlu0 14
        %419 = vperm.xlu0 %418, %v355
        %v420 = vpop.permute.xlu0 %419
        %422 = vset.pattern.permute.xlu0 14
        %423 = vperm.xlu0 %422, %v356
        %v424 = vpop.permute.xlu0 %423
        %426 = vset.pattern.permute.xlu0 14
        %427 = vperm.xlu0 %426, %v357
        %v428 = vpop.permute.xlu0 %427
        %430 = vset.pattern.permute.xlu0 14
        %431 = vperm.xlu0 %430, %v358
        %v432 = vpop.permute.xlu0 %431
        %434 = vset.pattern.permute.xlu0 14
        %435 = vperm.xlu0 %434, %v359
        %v436 = vpop.permute.xlu0 %435
        %438 = vset.pattern.permute.xlu0 14
        %439 = vperm.xlu0 %438, %v360
        %v440 = vpop.permute.xlu0 %439
        %v442 = vsel %vm409, %v412, %v401
        %v443 = vsel %vm409, %v416, %v402
        %v444 = vsel %vm409, %v420, %v403
        %v445 = vsel %vm409, %v424, %v404
        %v446 = vsel %vm409, %v428, %v405
        %v447 = vsel %vm409, %v432, %v406
        %v448 = vsel %vm409, %v436, %v407
        %v449 = vsel %vm409, %v440, %v408
        %v450 = vadd.f32 %v442, %v260
        %v451 = vadd.f32 %v443, %v261
        %v452 = vadd.f32 %v444, %v262
        %v453 = vadd.f32 %v445, %v263
        %v454 = vadd.f32 %v446, %v264
        %v455 = vadd.f32 %v447, %v265
        %v456 = vadd.f32 %v448, %v266
        %v457 = vadd.f32 %v449, %v267
        %vm458 = vcmask 130048
        %459 = vst.msk [vmem:[%s135] sm:$0xff] %vm458, %v450
        %460 = vst.msk [vmem:[%s135 + $0x8] sm:$0xff] %vm458, %v451
        %461 = vst.msk [vmem:[%s135 + $0x10] sm:$0xff] %vm458, %v452
        %462 = vst.msk [vmem:[%s135 + $0x18] sm:$0xff] %vm458, %v453
        %463 = vst.msk [vmem:[%s135 + $0x20] sm:$0xff] %vm458, %v454
        %464 = vst.msk [vmem:[%s135 + $0x28] sm:$0xff] %vm458, %v455
        %465 = vst.msk [vmem:[%s135 + $0x30] sm:$0xff] %vm458, %v456
        %466 = vst.msk [vmem:[%s135 + $0x38] sm:$0xff] %vm458, %v457
        %s467 = sand.u32 %s52, 1
        %s468 = scalar_lea.sflag [#allocation4], %s467
        %s469 = sand.u32 %s52, 1
        %s470 = smul.addr %s469, 64
        %s471 = scalar_lea.vmem [#allocation5], %s470
        // Predicated region
        $region29: #{image_smooth_forward.1} parent=23 // pred_check
          %p472 = pneg %p62
        $region30: #{image_smooth_forward.1} parent=23 // pred_check_branch
          %474 = sbr.rel (%p472) target = $region32
        $region31: #{image_smooth_forward.1} parent=23 // pred_region
          %s475 = smul.u32 4, %s18
          %s477 = ssub.s32 1024, 1024
          %478 = vsyncadd %s468, %s477
          %s479 = smul.addr %s475, 2
          %s480 = smul.addr %s479, 128
          %s481 = scalar_lea.hbm %s1, %s480
          %s482 = sshll.u32 %s471, 4
          %s483 = int_to_ptr.vmem [resolvable:$true] %s482
          %488 = dma.vmem_to_hbm [thread:$0]  %s483, 1024, %s481, %s468, 128, 128, 8
        $region32: #{image_smooth_forward.1} parent=23 // pred_fallthru
          _
      $region24: #{image_smooth_forward.1} parent=5 // pred_fallthru
        _
      %p489 = scmp.le.s32.totalorder 2, %s13
      // Predicated region
      $region33: #{image_smooth_forward.1} parent=5 // pred_check
        %p490 = pneg %p489
      $region34: #{image_smooth_forward.1} parent=5 // pred_check_branch
        %492 = sbr.rel (%p490) target = $region36
      $region35: #{image_smooth_forward.1} parent=5 // pred_region
        %s493 = ssub.s32 %s13, 2
        // Predicated region
        $region37: #{image_smooth_forward.1} parent=35 // pred_check
          %p494 = pneg %p68
        $region38: #{image_smooth_forward.1} parent=35 // pred_check_branch
          %496 = sbr.rel (%p494) target = $region40
        $region39: #{image_smooth_forward.1} parent=35 // pred_region
          %s497 = sand.u32 %s53, 1
          %s498 = scalar_lea.sflag [#allocation4], %s497
          %s499 = sand.u32 %s53, 1
          %s500 = smul.addr %s499, 64
          %s501 = scalar_lea.vmem [#allocation5], %s500
          %502 = dma.done %s498, 1024
        $region40: #{image_smooth_forward.1} parent=35 // pred_fallthru
          _
      $region36: #{image_smooth_forward.1} parent=5 // pred_fallthru
        _
    $region6: #{image_smooth_forward.1} parent=1 // loop_footer
      %s17 = sadd.s32 1, %s13
    $region7: #{image_smooth_forward.1} parent=1 // loop_footer_branch
      %12 = sbr.rel target = $region3
    $region8: #{image_smooth_forward.1} parent=1 // loop_exit
      _
    %503 = vsyncpa [#allocation3], 1
    %s504 = scalar_lea.sflag [#allocation3], 1
    %505 = vsyncpa %s504, 1
    %506 = vsyncpa [#allocation4], 1
    %s507 = scalar_lea.sflag [#allocation4], 1
    %508 = vsyncpa %s507, 1

</llo_original>
